<compile_context>
chip_gen: v5e
topology: v5e:2x2
jax: 0.10.0
libtpu: 0.0.40
codegen_flags: <defaults>
</compile_context>

<pallas_src>
import jax
import jax.numpy as jnp
from jax.experimental import pallas as pl
from jax.experimental.pallas import tpu as pltpu


def _round_up(n: int, k: int) -> int:
    return ((n + k - 1) // k) * k


def _gather_kernel(idx_ref, m_ref, out_ref):
    # idx_ref : (TILE_T, 1) int32 token ids for this token tile (VMEM)
    # m_ref   : (V_pad, C_pad) fused lookup table emb @ W^T + bias (VMEM resident)
    # out_ref : (TILE_T, C_pad) lane-dense output slab
    tile_t = idx_ref.shape[0]
    v_pad = m_ref.shape[0]

    ids = idx_ref[...]                                               # (TILE_T, 1)
    lane = jax.lax.broadcasted_iota(jnp.int32, (tile_t, v_pad), 1)   # (TILE_T, V_pad)
    onehot = (lane == ids).astype(m_ref.dtype)                       # exact one-hot rows
    # MXU gather: selects M[ids] rows; f32 accumulate.
    out_ref[...] = jnp.dot(
        onehot, m_ref[...], preferred_element_type=jnp.float32
    ).astype(out_ref.dtype)


def dac_embedding_projection(x, emb_weight, conv_v, conv_g, conv_bias, *, tile_t=256):
    """x: (B, T) int32 token ids; emb_weight: (V, D_in); conv_v: (C_out, D_in, 1);
    conv_g: (C_out, 1, 1); conv_bias: (C_out,). Returns (B, T, C_out) float32."""
    B, T = x.shape
    V, D_in = emb_weight.shape
    C_out = conv_v.shape[0]

    # torch.nn.utils.weight_norm (dim=0): w = g * v / ||v||_2 over dims (1, 2).
    # (No eps, matching PyTorch.)
    v32 = conv_v.astype(jnp.float32)
    v_norm = jnp.sqrt(jnp.sum(v32 * v32, axis=(1, 2), keepdims=True))
    w = (conv_g.astype(jnp.float32) * v32 / v_norm)[:, :, 0]        # (C_out, D_in)

    # Fused lookup table: M[v] = emb[v] @ W^T + bias  -> (V, C_out).
    # Under jit with static weights this is constant-folded; per call only the
    # token ids and the (N, C_out) output cross HBM.
    m = jnp.dot(
        emb_weight.astype(jnp.float32), w.T, preferred_element_type=jnp.float32
    ) + conv_bias.astype(jnp.float32)

    # Pad to lane-friendly sizes (multiples of 128 on the minor dims).
    v_pad = _round_up(V, 128)
    c_pad = _round_up(C_out, 128)
    m_pad = jnp.zeros((v_pad, c_pad), jnp.float32).at[:V, :C_out].set(m)

    # Flatten and pad the token axis to a multiple of the tile size.
    N = B * T
    n_pad = _round_up(max(N, tile_t), tile_t)
    idx = jnp.zeros((n_pad, 1), jnp.int32).at[:N, 0].set(x.reshape(-1).astype(jnp.int32))

    grid = (n_pad // tile_t,)
    out = pl.pallas_call(
        _gather_kernel,
        out_shape=jax.ShapeDtypeStruct((n_pad, c_pad), jnp.float32),
        grid_spec=pltpu.PrefetchScalarGridSpec(
            num_scalar_prefetch=0,
            grid=grid,
            in_specs=[
                # Token ids for this tile.
                pl.BlockSpec((tile_t, 1), lambda i: (i, 0)),
                # Fused lookup table, resident in VMEM every step.
                pl.BlockSpec((v_pad, c_pad), lambda i: (0, 0)),
            ],
            out_specs=pl.BlockSpec((tile_t, c_pad), lambda i: (i, 0)),
        ),
        compiler_params=pltpu.CompilerParams(
            # Token tiles are fully independent -> megacore-shardable on v7x.
            dimension_semantics=("parallel",),
        ),
    )(idx, m_pad)

    return out[:N, :C_out].reshape(B, T, C_out)


if __name__ == "__main__":
    B, T = 2, 8      # batch, sequence length
    V = 16           # codebook size (nn.Embedding num_embeddings)
    D_IN = 32        # embedding dim == Conv1d in_channels
    C_OUT = 64       # Conv1d out_channels

    key = jax.random.PRNGKey(0)
    k_emb, k_v, k_g, k_b, k_x = jax.random.split(key, 5)
    emb_weight = jax.random.normal(k_emb, (V, D_IN), dtype=jnp.float32)
    conv_v = jax.random.normal(k_v, (C_OUT, D_IN, 1), dtype=jnp.float32) * 0.1
    conv_g = jax.random.normal(k_g, (C_OUT, 1, 1), dtype=jnp.float32)
    conv_bias = jax.random.normal(k_b, (C_OUT,), dtype=jnp.float32) * 0.01
    x = jax.random.randint(k_x, (B, T), 0, V, dtype=jnp.int32)

    fwd = jax.jit(dac_embedding_projection)
    out = fwd(x, emb_weight, conv_v, conv_g, conv_bias)
    out = jax.block_until_ready(out)

    # Pure-JAX reference (PyTorch op order: embed -> weight-norm conv1x1 -> bias).
    v_norm = jnp.sqrt(jnp.sum(conv_v ** 2, axis=(1, 2), keepdims=True))
    w_ref = (conv_g * conv_v / v_norm)[:, :, 0]                  # (C_OUT, D_IN)
    ref = jnp.take(emb_weight, x, axis=0) @ w_ref.T + conv_bias  # (B, T, C_OUT)

    assert out.shape == (B, T, C_OUT)
    assert jnp.allclose(out, ref, atol=1e-4, rtol=1e-4)
    print("KERNEL_OK")
</pallas_src>

<mosaic_0001>
module attributes {stable_mosaic.version = 11 : i64} {
  func.func @_gather_kernel(%arg0: i32, %arg1: memref<256x1xi32, #tpu.memory_space<vmem>>, %arg2: memref<128x128xf32, #tpu.memory_space<vmem>>, %arg3: memref<256x128xf32, #tpu.memory_space<vmem>>) attributes {dimension_semantics = [#tpu.dimension_semantics<parallel>], iteration_bounds = array<i64: 1>, scalar_prefetch = 0 : i64, scratch_operands = 0 : i64, tpu.core_type = #tpu.core_type<tc>, window_params = [{transform_indices = @transform_0, window_bounds = array<i64: 256, 1>}, {pipeline_mode = #tpu.pipeline_mode<synchronous>, transform_indices = @transform_1, window_bounds = array<i64: 128, 128>}, {transform_indices = @transform_2, window_bounds = array<i64: 256, 128>}]} {
    %c0 = arith.constant 0 : index
    %c0_0 = arith.constant 0 : index
    %0 = vector.load %arg1[%c0, %c0_0] : memref<256x1xi32, #tpu.memory_space<vmem>>, vector<256x1xi32>
    %1 = tpu.iota {dimensions = array<i32: 1>} : vector<256x128xi32>
    %2 = vector.broadcast %0 : vector<256x1xi32> to vector<256x128xi32>
    %3 = arith.cmpi eq, %1, %2 : vector<256x128xi32>
    %4 = arith.extui %3 : vector<256x128xi1> to vector<256x128xi32>
    %5 = arith.sitofp %4 : vector<256x128xi32> to vector<256x128xf32>
    %c0_1 = arith.constant 0 : index
    %c0_2 = arith.constant 0 : index
    %6 = vector.load %arg2[%c0_1, %c0_2] : memref<128x128xf32, #tpu.memory_space<vmem>>, vector<128x128xf32>
    %cst = arith.constant dense<0.000000e+00> : vector<256x128xf32>
    %7 = tpu.matmul %5, %6, %cst {dimension_numbers = #tpu.dot_dimension_numbers<[1], [0], [0], [1], [0, 0, 1, 1], [], []>} : vector<256x128xf32>, vector<128x128xf32>, vector<256x128xf32> -> vector<256x128xf32>
    %c0_3 = arith.constant 0 : index
    %c0_4 = arith.constant 0 : index
    %8 = vector.load %arg3[%c0_3, %c0_4] : memref<256x128xf32, #tpu.memory_space<vmem>>, vector<256x128xf32>
    tpu.vector_store %arg3[%c0_3, %c0_4], %7 {strides = array<i32>} : memref<256x128xf32, #tpu.memory_space<vmem>>, vector<256x128xf32>,
    return
  }
  func.func @transform_0(%arg0: i32) -> (i32, i32) {
    %c0_i32 = arith.constant 0 : i32
    %c0_i32_0 = arith.constant 0 : i32
    return %arg0, %c0_i32 : i32, i32
  }
  func.func @transform_1(%arg0: i32) -> (i32, i32) {
    %c0_i32 = arith.constant 0 : i32
    %c0_i32_0 = arith.constant 0 : i32
    %c0_i32_1 = arith.constant 0 : i32
    return %c0_i32, %c0_i32_0 : i32, i32
  }
  func.func @transform_2(%arg0: i32) -> (i32, i32) {
    %c0_i32 = arith.constant 0 : i32
    %c0_i32_0 = arith.constant 0 : i32
    return %arg0, %c0_i32 : i32, i32
  }
}

</mosaic_0001>

<llo_original>
// kernel: dac_embedding_projection.1
$region0: #{dac_embedding_projection.1}
  #allocation0 [shape = 'u32[]', space=smem, size = 0x4, offset = 0x4, fixed_abs, tag = 'smem constant byte address 0x4 - core index']
  #allocation1 [shape = 'u32[72,128]{1,0:T(1,128)}', space=vmem, size = 0x9000, scoped, tag = 'internal scratch']
  %s0 = inlined_call_operand.vmem [shape: s32[256,1], index: 0, kind: input, shape index: {}]
  %s1 = inlined_call_operand.vmem [shape: f32[128,128], index: 1, kind: input, shape index: {}]
  %s2 = inlined_call_operand.vmem [shape: f32[256,128], index: 2, kind: output, shape index: {}]
  %s3 = sld [smem:[#allocation0]]
  $region18: #{dac_embedding_projection.1} parent=0
    _
  %s5 = ssub.s32 1, %s3
  %s6 = scalar_select 0, %s5, %s3
  // Predicated region
  $region2: #{dac_embedding_projection.1} parent=0 // pred_check
    _
  $region3: #{dac_embedding_projection.1} parent=0 // pred_check_branch
    %8 = sbr.rel (0) target = $region5
  $region4: #{dac_embedding_projection.1} parent=0 // pred_region
    _
  $region5: #{dac_embedding_projection.1} parent=0 // pred_fallthru
    _
  // Predicated region
  $region6: #{dac_embedding_projection.1} parent=0 // pred_check
    _
  $region7: #{dac_embedding_projection.1} parent=0 // pred_check_branch
    %10 = sbr.rel (0) target = $region9
  $region8: #{dac_embedding_projection.1} parent=0 // pred_region
    _
  $region9: #{dac_embedding_projection.1} parent=0 // pred_fallthru
    _
  %v11 = vld [vmem:[%s0] sm:$0xff]
  %v12 = vld [vmem:[%s0 + $0x8] sm:$0xff]
  %v13 = vld [vmem:[%s0 + $0x10] sm:$0xff]
  %v14 = vld [vmem:[%s0 + $0x18] sm:$0xff]
  %v15 = vld [vmem:[%s0 + $0x20] sm:$0xff]
  %v16 = vld [vmem:[%s0 + $0x28] sm:$0xff]
  %v17 = vld [vmem:[%s0 + $0x30] sm:$0xff]
  %v18 = vld [vmem:[%s0 + $0x38] sm:$0xff]
  %v19 = vld [vmem:[%s0 + $0x40] sm:$0xff]
  %v20 = vld [vmem:[%s0 + $0x48] sm:$0xff]
  %v21 = vld [vmem:[%s0 + $0x50] sm:$0xff]
  %v22 = vld [vmem:[%s0 + $0x58] sm:$0xff]
  %v23 = vld [vmem:[%s0 + $0x60] sm:$0xff]
  %v24 = vld [vmem:[%s0 + $0x68] sm:$0xff]
  %v25 = vld [vmem:[%s0 + $0x70] sm:$0xff]
  %v26 = vld [vmem:[%s0 + $0x78] sm:$0xff]
  %v27 = vld [vmem:[%s0 + $0x80] sm:$0xff]
  %v28 = vld [vmem:[%s0 + $0x88] sm:$0xff]
  %v29 = vld [vmem:[%s0 + $0x90] sm:$0xff]
  %v30 = vld [vmem:[%s0 + $0x98] sm:$0xff]
  %v31 = vld [vmem:[%s0 + $0xa0] sm:$0xff]
  %v32 = vld [vmem:[%s0 + $0xa8] sm:$0xff]
  %v33 = vld [vmem:[%s0 + $0xb0] sm:$0xff]
  %v34 = vld [vmem:[%s0 + $0xb8] sm:$0xff]
  %v35 = vld [vmem:[%s0 + $0xc0] sm:$0xff]
  %v36 = vld [vmem:[%s0 + $0xc8] sm:$0xff]
  %v37 = vld [vmem:[%s0 + $0xd0] sm:$0xff]
  %v38 = vld [vmem:[%s0 + $0xd8] sm:$0xff]
  %v39 = vld [vmem:[%s0 + $0xe0] sm:$0xff]
  %v40 = vld [vmem:[%s0 + $0xe8] sm:$0xff]
  %v41 = vld [vmem:[%s0 + $0xf0] sm:$0xff]
  %v42 = vld [vmem:[%s0 + $0xf8] sm:$0xff]
  %v43 = vlaneseq
  %v44 = vand.u32 %v43, 127
  %45 = vset.pattern.permute.xlu0 0
  %46 = vperm.xlu0 %45, %v11
  %v47 = vpop.permute.xlu0 %46
  %48 = vset.pattern.permute.xlu0 0
  %49 = vperm.xlu0 %48, %v12
  %v50 = vpop.permute.xlu0 %49
  %51 = vset.pattern.permute.xlu0 0
  %52 = vperm.xlu0 %51, %v13
  %v53 = vpop.permute.xlu0 %52
  %54 = vset.pattern.permute.xlu0 0
  %55 = vperm.xlu0 %54, %v14
  %v56 = vpop.permute.xlu0 %55
  %57 = vset.pattern.permute.xlu0 0
  %58 = vperm.xlu0 %57, %v15
  %v59 = vpop.permute.xlu0 %58
  %60 = vset.pattern.permute.xlu0 0
  %61 = vperm.xlu0 %60, %v16
  %v62 = vpop.permute.xlu0 %61
  %63 = vset.pattern.permute.xlu0 0
  %64 = vperm.xlu0 %63, %v17
  %v65 = vpop.permute.xlu0 %64
  %66 = vset.pattern.permute.xlu0 0
  %67 = vperm.xlu0 %66, %v18
  %v68 = vpop.permute.xlu0 %67
  %69 = vset.pattern.permute.xlu0 0
  %70 = vperm.xlu0 %69, %v19
  %v71 = vpop.permute.xlu0 %70
  %72 = vset.pattern.permute.xlu0 0
  %73 = vperm.xlu0 %72, %v20
  %v74 = vpop.permute.xlu0 %73
  %75 = vset.pattern.permute.xlu0 0
  %76 = vperm.xlu0 %75, %v21
  %v77 = vpop.permute.xlu0 %76
  %78 = vset.pattern.permute.xlu0 0
  %79 = vperm.xlu0 %78, %v22
  %v80 = vpop.permute.xlu0 %79
  %81 = vset.pattern.permute.xlu0 0
  %82 = vperm.xlu0 %81, %v23
  %v83 = vpop.permute.xlu0 %82
  %84 = vset.pattern.permute.xlu0 0
  %85 = vperm.xlu0 %84, %v24
  %v86 = vpop.permute.xlu0 %85
  %87 = vset.pattern.permute.xlu0 0
  %88 = vperm.xlu0 %87, %v25
  %v89 = vpop.permute.xlu0 %88
  %90 = vset.pattern.permute.xlu0 0
  %91 = vperm.xlu0 %90, %v26
  %v92 = vpop.permute.xlu0 %91
  %93 = vset.pattern.permute.xlu0 0
  %94 = vperm.xlu0 %93, %v27
  %v95 = vpop.permute.xlu0 %94
  %96 = vset.pattern.permute.xlu0 0
  %97 = vperm.xlu0 %96, %v28
  %v98 = vpop.permute.xlu0 %97
  %99 = vset.pattern.permute.xlu0 0
  %100 = vperm.xlu0 %99, %v29
  %v101 = vpop.permute.xlu0 %100
  %102 = vset.pattern.permute.xlu0 0
  %103 = vperm.xlu0 %102, %v30
  %v104 = vpop.permute.xlu0 %103
  %105 = vset.pattern.permute.xlu0 0
  %106 = vperm.xlu0 %105, %v31
  %v107 = vpop.permute.xlu0 %106
  %108 = vset.pattern.permute.xlu0 0
  %109 = vperm.xlu0 %108, %v32
  %v110 = vpop.permute.xlu0 %109
  %111 = vset.pattern.permute.xlu0 0
  %112 = vperm.xlu0 %111, %v33
  %v113 = vpop.permute.xlu0 %112
  %114 = vset.pattern.permute.xlu0 0
  %115 = vperm.xlu0 %114, %v34
  %v116 = vpop.permute.xlu0 %115
  %117 = vset.pattern.permute.xlu0 0
  %118 = vperm.xlu0 %117, %v35
  %v119 = vpop.permute.xlu0 %118
  %120 = vset.pattern.permute.xlu0 0
  %121 = vperm.xlu0 %120, %v36
  %v122 = vpop.permute.xlu0 %121
  %123 = vset.pattern.permute.xlu0 0
  %124 = vperm.xlu0 %123, %v37
  %v125 = vpop.permute.xlu0 %124
  %126 = vset.pattern.permute.xlu0 0
  %127 = vperm.xlu0 %126, %v38
  %v128 = vpop.permute.xlu0 %127
  %129 = vset.pattern.permute.xlu0 0
  %130 = vperm.xlu0 %129, %v39
  %v131 = vpop.permute.xlu0 %130
  %132 = vset.pattern.permute.xlu0 0
  %133 = vperm.xlu0 %132, %v40
  %v134 = vpop.permute.xlu0 %133
  %135 = vset.pattern.permute.xlu0 0
  %136 = vperm.xlu0 %135, %v41
  %v137 = vpop.permute.xlu0 %136
  %138 = vset.pattern.permute.xlu0 0
  %139 = vperm.xlu0 %138, %v42
  %v140 = vpop.permute.xlu0 %139
  %vm141 = vcmp.eq.s32.totalorder %v44, %v47
  %vm142 = vcmp.eq.s32.totalorder %v44, %v50
  %vm143 = vcmp.eq.s32.totalorder %v44, %v53
  %vm144 = vcmp.eq.s32.totalorder %v44, %v56
  %vm145 = vcmp.eq.s32.totalorder %v44, %v59
  %vm146 = vcmp.eq.s32.totalorder %v44, %v62
  %vm147 = vcmp.eq.s32.totalorder %v44, %v65
  %vm148 = vcmp.eq.s32.totalorder %v44, %v68
  %vm149 = vcmp.eq.s32.totalorder %v44, %v71
  %vm150 = vcmp.eq.s32.totalorder %v44, %v74
  %vm151 = vcmp.eq.s32.totalorder %v44, %v77
  %vm152 = vcmp.eq.s32.totalorder %v44, %v80
  %vm153 = vcmp.eq.s32.totalorder %v44, %v83
  %vm154 = vcmp.eq.s32.totalorder %v44, %v86
  %vm155 = vcmp.eq.s32.totalorder %v44, %v89
  %vm156 = vcmp.eq.s32.totalorder %v44, %v92
  %vm157 = vcmp.eq.s32.totalorder %v44, %v95
  %vm158 = vcmp.eq.s32.totalorder %v44, %v98
  %vm159 = vcmp.eq.s32.totalorder %v44, %v101
  %vm160 = vcmp.eq.s32.totalorder %v44, %v104
  %vm161 = vcmp.eq.s32.totalorder %v44, %v107
  %vm162 = vcmp.eq.s32.totalorder %v44, %v110
  %vm163 = vcmp.eq.s32.totalorder %v44, %v113
  %vm164 = vcmp.eq.s32.totalorder %v44, %v116
  %vm165 = vcmp.eq.s32.totalorder %v44, %v119
  %vm166 = vcmp.eq.s32.totalorder %v44, %v122
  %vm167 = vcmp.eq.s32.totalorder %v44, %v125
  %vm168 = vcmp.eq.s32.totalorder %v44, %v128
  %vm169 = vcmp.eq.s32.totalorder %v44, %v131
  %vm170 = vcmp.eq.s32.totalorder %v44, %v134
  %vm171 = vcmp.eq.s32.totalorder %v44, %v137
  %vm172 = vcmp.eq.s32.totalorder %v44, %v140
  %v173 = vsel %vm141, 1, 0
  %v174 = vsel %vm142, 1, 0
  %v175 = vsel %vm143, 1, 0
  %v176 = vsel %vm144, 1, 0
  %v177 = vsel %vm145, 1, 0
  %v178 = vsel %vm146, 1, 0
  %v179 = vsel %vm147, 1, 0
  %v180 = vsel %vm148, 1, 0
  %v181 = vsel %vm149, 1, 0
  %v182 = vsel %vm150, 1, 0
  %v183 = vsel %vm151, 1, 0
  %v184 = vsel %vm152, 1, 0
  %v185 = vsel %vm153, 1, 0
  %v186 = vsel %vm154, 1, 0
  %v187 = vsel %vm155, 1, 0
  %v188 = vsel %vm156, 1, 0
  %v189 = vsel %vm157, 1, 0
  %v190 = vsel %vm158, 1, 0
  %v191 = vsel %vm159, 1, 0
  %v192 = vsel %vm160, 1, 0
  %v193 = vsel %vm161, 1, 0
  %v194 = vsel %vm162, 1, 0
  %v195 = vsel %vm163, 1, 0
  %v196 = vsel %vm164, 1, 0
  %v197 = vsel %vm165, 1, 0
  %v198 = vsel %vm166, 1, 0
  %v199 = vsel %vm167, 1, 0
  %v200 = vsel %vm168, 1, 0
  %v201 = vsel %vm169, 1, 0
  %v202 = vsel %vm170, 1, 0
  %v203 = vsel %vm171, 1, 0
  %v204 = vsel %vm172, 1, 0
  %v205 = vcvt.s32.f32 %v173
  %v206 = vcvt.s32.f32 %v174
  %v207 = vcvt.s32.f32 %v175
  %v208 = vcvt.s32.f32 %v176
  %v209 = vcvt.s32.f32 %v177
  %v210 = vcvt.s32.f32 %v178
  %v211 = vcvt.s32.f32 %v179
  %v212 = vcvt.s32.f32 %v180
  %v213 = vcvt.s32.f32 %v181
  %v214 = vcvt.s32.f32 %v182
  %v215 = vcvt.s32.f32 %v183
  %v216 = vcvt.s32.f32 %v184
  %v217 = vcvt.s32.f32 %v185
  %v218 = vcvt.s32.f32 %v186
  %v219 = vcvt.s32.f32 %v187
  %v220 = vcvt.s32.f32 %v188
  %v221 = vcvt.s32.f32 %v189
  %v222 = vcvt.s32.f32 %v190
  %v223 = vcvt.s32.f32 %v191
  %v224 = vcvt.s32.f32 %v192
  %v225 = vcvt.s32.f32 %v193
  %v226 = vcvt.s32.f32 %v194
  %v227 = vcvt.s32.f32 %v195
  %v228 = vcvt.s32.f32 %v196
  %v229 = vcvt.s32.f32 %v197
  %v230 = vcvt.s32.f32 %v198
  %v231 = vcvt.s32.f32 %v199
  %v232 = vcvt.s32.f32 %v200
  %v233 = vcvt.s32.f32 %v201
  %v234 = vcvt.s32.f32 %v202
  %v235 = vcvt.s32.f32 %v203
  %v236 = vcvt.s32.f32 %v204
  %v237 = vld [vmem:[%s1] sm:$0xff]
  %v238 = vld [vmem:[%s1 + $0x8] sm:$0xff]
  %v239 = vld [vmem:[%s1 + $0x10] sm:$0xff]
  %v240 = vld [vmem:[%s1 + $0x18] sm:$0xff]
  %v241 = vld [vmem:[%s1 + $0x20] sm:$0xff]
  %v242 = vld [vmem:[%s1 + $0x28] sm:$0xff]
  %v243 = vld [vmem:[%s1 + $0x30] sm:$0xff]
  %v244 = vld [vmem:[%s1 + $0x38] sm:$0xff]
  %v245 = vld [vmem:[%s1 + $0x40] sm:$0xff]
  %v246 = vld [vmem:[%s1 + $0x48] sm:$0xff]
  %v247 = vld [vmem:[%s1 + $0x50] sm:$0xff]
  %v248 = vld [vmem:[%s1 + $0x58] sm:$0xff]
  %v249 = vld [vmem:[%s1 + $0x60] sm:$0xff]
  %v250 = vld [vmem:[%s1 + $0x68] sm:$0xff]
  %v251 = vld [vmem:[%s1 + $0x70] sm:$0xff]
  %v252 = vld [vmem:[%s1 + $0x78] sm:$0xff]
  %253 = vmatpush.msra.mxu0 %v252
  %254 = vmatpush.msra.mxu0 %v251
  %255 = vmatpush.msra.mxu0 %v250
  %256 = vmatpush.msra.mxu0 %v249
  %257 = vmatpush.msra.mxu0 %v248
  %258 = vmatpush.msra.mxu0 %v247
  %259 = vmatpush.msra.mxu0 %v246
  %260 = vmatpush.msra.mxu0 %v245
  %261 = vmatpush.msra.mxu0 %v244
  %262 = vmatpush.msra.mxu0 %v243
  %263 = vmatpush.msra.mxu0 %v242
  %264 = vmatpush.msra.mxu0 %v241
  %265 = vmatpush.msra.mxu0 %v240
  %266 = vmatpush.msra.mxu0 %v239
  %267 = vmatpush.msra.mxu0 %v238
  %268 = vmatpush.msra.mxu0 %v237
  %269 = vmatmul.f32.gmra.mxu0 %v205
  %v270 = vpop.f32.mrf.mxu0
  %v271 = vadd.f32 0.0, %v270
  %272 = vmatmul.f32.gmra.mxu0 %v206
  %v273 = vpop.f32.mrf.mxu0
  %v274 = vadd.f32 0.0, %v273
  %275 = vmatmul.f32.gmra.mxu0 %v207
  %v276 = vpop.f32.mrf.mxu0
  %v277 = vadd.f32 0.0, %v276
  %278 = vmatmul.f32.gmra.mxu0 %v208
  %v279 = vpop.f32.mrf.mxu0
  %v280 = vadd.f32 0.0, %v279
  %281 = vmatmul.f32.gmra.mxu0 %v209
  %v282 = vpop.f32.mrf.mxu0
  %v283 = vadd.f32 0.0, %v282
  %284 = vmatmul.f32.gmra.mxu0 %v210
  %v285 = vpop.f32.mrf.mxu0
  %v286 = vadd.f32 0.0, %v285
  %287 = vmatmul.f32.gmra.mxu0 %v211
  %v288 = vpop.f32.mrf.mxu0
  %v289 = vadd.f32 0.0, %v288
  %290 = vmatmul.f32.gmra.mxu0 %v212
  %v291 = vpop.f32.mrf.mxu0
  %v292 = vadd.f32 0.0, %v291
  %293 = vmatmul.f32.gmra.mxu0 %v213
  %v294 = vpop.f32.mrf.mxu0
  %v295 = vadd.f32 0.0, %v294
  %296 = vmatmul.f32.gmra.mxu0 %v214
  %v297 = vpop.f32.mrf.mxu0
  %v298 = vadd.f32 0.0, %v297
  %299 = vmatmul.f32.gmra.mxu0 %v215
  %v300 = vpop.f32.mrf.mxu0
  %v301 = vadd.f32 0.0, %v300
  %302 = vmatmul.f32.gmra.mxu0 %v216
  %v303 = vpop.f32.mrf.mxu0
  %v304 = vadd.f32 0.0, %v303
  %305 = vmatmul.f32.gmra.mxu0 %v217
  %v306 = vpop.f32.mrf.mxu0
  %v307 = vadd.f32 0.0, %v306
  %308 = vmatmul.f32.gmra.mxu0 %v218
  %v309 = vpop.f32.mrf.mxu0
  %v310 = vadd.f32 0.0, %v309
  %311 = vmatmul.f32.gmra.mxu0 %v219
  %v312 = vpop.f32.mrf.mxu0
  %v313 = vadd.f32 0.0, %v312
  %314 = vmatmul.f32.gmra.mxu0 %v220
  %v315 = vpop.f32.mrf.mxu0
  %v316 = vadd.f32 0.0, %v315
  %317 = vmatmul.f32.gmra.mxu0 %v221
  %v318 = vpop.f32.mrf.mxu0
  %v319 = vadd.f32 0.0, %v318
  %320 = vmatmul.f32.gmra.mxu0 %v222
  %v321 = vpop.f32.mrf.mxu0
  %v322 = vadd.f32 0.0, %v321
  %323 = vmatmul.f32.gmra.mxu0 %v223
  %v324 = vpop.f32.mrf.mxu0
  %v325 = vadd.f32 0.0, %v324
  %326 = vmatmul.f32.gmra.mxu0 %v224
  %v327 = vpop.f32.mrf.mxu0
  %v328 = vadd.f32 0.0, %v327
  %329 = vmatmul.f32.gmra.mxu0 %v225
  %v330 = vpop.f32.mrf.mxu0
  %v331 = vadd.f32 0.0, %v330
  %332 = vmatmul.f32.gmra.mxu0 %v226
  %v333 = vpop.f32.mrf.mxu0
  %v334 = vadd.f32 0.0, %v333
  %335 = vmatmul.f32.gmra.mxu0 %v227
  %v336 = vpop.f32.mrf.mxu0
  %v337 = vadd.f32 0.0, %v336
  %338 = vmatmul.f32.gmra.mxu0 %v228
  %v339 = vpop.f32.mrf.mxu0
  %v340 = vadd.f32 0.0, %v339
  %341 = vmatmul.f32.gmra.mxu0 %v229
  %v342 = vpop.f32.mrf.mxu0
  %v343 = vadd.f32 0.0, %v342
  %344 = vmatmul.f32.gmra.mxu0 %v230
  %v345 = vpop.f32.mrf.mxu0
  %v346 = vadd.f32 0.0, %v345
  %347 = vmatmul.f32.gmra.mxu0 %v231
  %v348 = vpop.f32.mrf.mxu0
  %v349 = vadd.f32 0.0, %v348
  %350 = vmatmul.f32.gmra.mxu0 %v232
  %v351 = vpop.f32.mrf.mxu0
  %v352 = vadd.f32 0.0, %v351
  %353 = vmatmul.f32.gmra.mxu0 %v233
  %v354 = vpop.f32.mrf.mxu0
  %v355 = vadd.f32 0.0, %v354
  %356 = vmatmul.f32.gmra.mxu0 %v234
  %v357 = vpop.f32.mrf.mxu0
  %v358 = vadd.f32 0.0, %v357
  %359 = vmatmul.f32.gmra.mxu0 %v235
  %v360 = vpop.f32.mrf.mxu0
  %v361 = vadd.f32 0.0, %v360
  %362 = vmatmul.f32.gmra.mxu0 %v236
  %v363 = vpop.f32.mrf.mxu0
  %v364 = vadd.f32 0.0, %v363
  %365 = vdwg.mxu0
  %366 = vst [vmem:[%s2] sm:$0xff] %v271
  %367 = vst [vmem:[%s2 + $0x8] sm:$0xff] %v274
  %368 = vst [vmem:[%s2 + $0x10] sm:$0xff] %v277
  %369 = vst [vmem:[%s2 + $0x18] sm:$0xff] %v280
  %370 = vst [vmem:[%s2 + $0x20] sm:$0xff] %v283
  %371 = vst [vmem:[%s2 + $0x28] sm:$0xff] %v286
  %372 = vst [vmem:[%s2 + $0x30] sm:$0xff] %v289
  %373 = vst [vmem:[%s2 + $0x38] sm:$0xff] %v292
  %374 = vst [vmem:[%s2 + $0x40] sm:$0xff] %v295
  %375 = vst [vmem:[%s2 + $0x48] sm:$0xff] %v298
  %376 = vst [vmem:[%s2 + $0x50] sm:$0xff] %v301
  %377 = vst [vmem:[%s2 + $0x58] sm:$0xff] %v304
  %378 = vst [vmem:[%s2 + $0x60] sm:$0xff] %v307
  %379 = vst [vmem:[%s2 + $0x68] sm:$0xff] %v310
  %380 = vst [vmem:[%s2 + $0x70] sm:$0xff] %v313
  %381 = vst [vmem:[%s2 + $0x78] sm:$0xff] %v316
  %382 = vst [vmem:[%s2 + $0x80] sm:$0xff] %v319
  %383 = vst [vmem:[%s2 + $0x88] sm:$0xff] %v322
  %384 = vst [vmem:[%s2 + $0x90] sm:$0xff] %v325
  %385 = vst [vmem:[%s2 + $0x98] sm:$0xff] %v328
  %386 = vst [vmem:[%s2 + $0xa0] sm:$0xff] %v331
  %387 = vst [vmem:[%s2 + $0xa8] sm:$0xff] %v334
  %388 = vst [vmem:[%s2 + $0xb0] sm:$0xff] %v337
  %389 = vst [vmem:[%s2 + $0xb8] sm:$0xff] %v340
  %390 = vst [vmem:[%s2 + $0xc0] sm:$0xff] %v343
  %391 = vst [vmem:[%s2 + $0xc8] sm:$0xff] %v346
  %392 = vst [vmem:[%s2 + $0xd0] sm:$0xff] %v349
  %393 = vst [vmem:[%s2 + $0xd8] sm:$0xff] %v352
  %394 = vst [vmem:[%s2 + $0xe0] sm:$0xff] %v355
  %395 = vst [vmem:[%s2 + $0xe8] sm:$0xff] %v358
  %396 = vst [vmem:[%s2 + $0xf0] sm:$0xff] %v361
  %397 = vst [vmem:[%s2 + $0xf8] sm:$0xff] %v364
  // Predicated region
  $region10: #{dac_embedding_projection.1} parent=0 // pred_check
    _
  $region11: #{dac_embedding_projection.1} parent=0 // pred_check_branch
    %399 = sbr.rel (0) target = $region13
  $region12: #{dac_embedding_projection.1} parent=0 // pred_region
    _
  $region13: #{dac_embedding_projection.1} parent=0 // pred_fallthru
    _
  // Predicated region
  $region14: #{dac_embedding_projection.1} parent=0 // pred_check
    _
  $region15: #{dac_embedding_projection.1} parent=0 // pred_check_branch
    %401 = sbr.rel (0) target = $region17
  $region16: #{dac_embedding_projection.1} parent=0 // pred_region
    _
  $region17: #{dac_embedding_projection.1} parent=0 // pred_fallthru
    _

</llo_original>
